<compile_context>
chip_gen: v5e
topology: v5e:2x2
jax: 0.10.0
libtpu: 0.0.40
codegen_flags: <defaults>
</compile_context>

<pallas_src>
import functools

import numpy as np

import jax
import jax.numpy as jnp
from jax.experimental import pallas as pl
from jax.experimental.pallas import tpu as pltpu

MEAN_BIAS = 0.0  # self.MeanBias in the module


def _round_up(x, m):
    return ((x + m - 1) // m) * m


def funk_svd_kernel(pu_ref, qi_ref, o_ref):
    # Single MXU pass per output tile. The folded bias rides along as the last
    # contraction term (ones column in pu x bias row in qi), so there is no
    # separate VPU broadcast-add.
    o_ref[...] = jnp.dot(pu_ref[...], qi_ref[...],
                         preferred_element_type=jnp.float32).astype(o_ref.dtype)


@functools.partial(jax.jit,
                   static_argnames=("tm", "tn", "input_dtype", "out_dtype"))
def funk_svd_forward(P, Q, user_bias, item_bias, user_indices, item_indices,
                     tm=1024, tn=2048,
                     input_dtype=jnp.bfloat16, out_dtype=jnp.float32):
    """Pallas-backed equivalent of FunkSVD.forward(user_indices, item_indices)."""
    assert user_indices.shape == item_indices.shape and user_indices.ndim == 1
    N = user_indices.shape[0]
    H = P.shape[1]
    Hp = H + 1                                     # +1 contraction row for bias

    in_sz = np.dtype(input_dtype).itemsize
    out_sz = np.dtype(out_dtype).itemsize

    # Gathers stay in plain JAX (note: jnp.take clamps OOB indices; torch raises).
    # TODO(synk): for production-sized index batches, fuse these gathers into the
    # kernel via pltpu.PrefetchScalarGridSpec(num_scalar_prefetch=2) + pl.Element
    # index_maps instead of materializing pu/qi in HBM.
    pu = jnp.take(P, user_indices, axis=0).astype(input_dtype)            # [N, H]
    qi = jnp.take(Q, item_indices, axis=1).astype(input_dtype)            # [H, N]
    bias = (jnp.take(user_bias, user_indices)
            + jnp.take(item_bias, item_indices) + MEAN_BIAS)              # [N] f32
    # Fold the (per-column) bias into the matmul: ones column + bias row.
    pu = jnp.concatenate([pu, jnp.ones((N, 1), input_dtype)], axis=1)     # [N, Hp]
    qi = jnp.concatenate([qi, bias.astype(input_dtype)[None, :]], axis=0) # [Hp, N]

    # Tile sizes: rows multiple of 16 (16-bit sublane packing) and cols multiple
    # of 128 (lane-dense, unmasked stores on the interior tiles).
    row_mult = 8 if (in_sz == 4 and out_sz == 4) else 16
    tm = min(tm, _round_up(N, row_mult))
    tn = min(tn, _round_up(N, 128))
    n_i = pl.cdiv(N, tm)   # row tiles
    n_j = pl.cdiv(N, tn)   # column tiles

    # Inputs are zero-padded to full tile multiples so edge blocks read zeros.
    # The OUTPUT stays exactly (N, N): Pallas masks the ragged edge stores, so
    # there is no post-kernel slice copy of the writeback-bound result buffer.
    pu = jnp.pad(pu, ((0, n_i * tm - N), (0, 0)))
    qi = jnp.pad(qi, ((0, 0), (0, n_j * tn - N)))

    if n_j >= 2 or n_i == 1:
        # j (column tiles) slow / i fast: the (Hp, tn) qi block stays resident
        # across the inner i sweep.
        grid = (n_j, n_i)
        pu_spec = pl.BlockSpec((tm, Hp), lambda j, i: (i, 0))
        qi_spec = pl.BlockSpec((Hp, tn), lambda j, i: (0, j))
        out_spec = pl.BlockSpec((tm, tn), lambda j, i: (i, j))
    else:
        # Only one column tile: lead with the row axis so the v7x megacore has
        # >= 2 slices to shard (harmless on single-TC v5e/v6e).
        grid = (n_i, n_j)
        pu_spec = pl.BlockSpec((tm, Hp), lambda i, j: (i, 0))
        qi_spec = pl.BlockSpec((Hp, tn), lambda i, j: (0, j))
        out_spec = pl.BlockSpec((tm, tn), lambda i, j: (i, j))

    # VMEM budget: the double-buffered output tile dominates; keep an explicit
    # limit well above v5e's 16 MiB default and well under v7x's 64 MiB/TC.
    needed = 2 * (tm * tn * out_sz + tm * Hp * in_sz + Hp * tn * in_sz)
    vmem_limit = int(min(max(needed + (8 << 20), 32 << 20), 48 << 20))

    cost = pl.CostEstimate(
        flops=2 * N * N * Hp,
        transcendentals=0,
        bytes_accessed=N * N * out_sz + 2 * N * Hp * in_sz,
    )

    return pl.pallas_call(
        funk_svd_kernel,
        out_shape=jax.ShapeDtypeStruct((N, N), out_dtype),
        grid=grid,
        in_specs=[pu_spec, qi_spec],
        out_specs=out_spec,
        compiler_params=pltpu.CompilerParams(
            dimension_semantics=("parallel", "parallel"),
            vmem_limit_bytes=vmem_limit,
        ),
        cost_estimate=cost,
    )(pu, qi)


def funk_svd_reference(P, Q, user_bias, item_bias, user_indices, item_indices):
    """Pure-f32 torch-equivalent reference."""
    dot = jnp.matmul(P[user_indices], Q[:, item_indices])
    return item_bias[item_indices] + user_bias[user_indices] + dot + MEAN_BIAS


def funk_svd_reference_matched(P, Q, user_bias, item_bias, user_indices,
                               item_indices, input_dtype=jnp.bfloat16):
    """Reference with the same input-dtype rounding as the kernel (f32 math)."""
    pu = P[user_indices].astype(input_dtype).astype(jnp.float32)
    qi = Q[:, item_indices].astype(input_dtype).astype(jnp.float32)
    bias = (user_bias[user_indices] + item_bias[item_indices] + MEAN_BIAS)
    bias = bias.astype(input_dtype).astype(jnp.float32)
    return jnp.matmul(pu, qi) + bias[None, :]


if __name__ == "__main__":
    # Module config: shape=(num_users, num_items), hidden_classes=20.
    num_users, num_items, hidden = 64, 48, 20
    n_idx = 8  # batch of (user, item) index pairs, equal length as torch requires

    key = jax.random.PRNGKey(0)
    k_p, k_q, k_ub, k_ib, k_u, k_i = jax.random.split(key, 6)

    # __init__ sets UserBias/ItemBias to zeros; use small random values here so
    # the folded-bias path is actually exercised (P, Q ~ N(init_mean=0, init_std=1)).
    P = jax.random.normal(k_p, (num_users, hidden), dtype=jnp.float32)
    Q = jax.random.normal(k_q, (hidden, num_items), dtype=jnp.float32)
    user_bias = 0.1 * jax.random.normal(k_ub, (num_users,), dtype=jnp.float32)
    item_bias = 0.1 * jax.random.normal(k_ib, (num_items,), dtype=jnp.float32)

    user_indices = jax.random.randint(k_u, (n_idx,), 0, num_users)
    item_indices = jax.random.randint(k_i, (n_idx,), 0, num_items)

    out = funk_svd_forward(P, Q, user_bias, item_bias, user_indices, item_indices)
    out = jax.block_until_ready(out)

    ref_matched = funk_svd_reference_matched(
        P, Q, user_bias, item_bias, user_indices, item_indices)
    ref_f32 = funk_svd_reference(
        P, Q, user_bias, item_bias, user_indices, item_indices)

    assert out.shape == ref_f32.shape == (n_idx, n_idx)
    assert out.dtype == jnp.float32
    # Tight check: kernel matches same-precision (bf16-rounded inputs, f32 acc) math.
    assert jnp.allclose(out, ref_matched, atol=1e-4, rtol=1e-4)
    # Semantics check vs. pure-f32 torch math: only bf16 input rounding differs.
    assert jnp.allclose(out, ref_f32, atol=2e-1, rtol=2e-2)

    print("KERNEL_OK")
</pallas_src>

<mosaic_0001>
module attributes {stable_mosaic.version = 11 : i64} {
  func.func @funk_svd_kernel(%arg0: i32, %arg1: i32, %arg2: memref<16x21xbf16, #tpu.memory_space<vmem>>, %arg3: memref<21x128xbf16, #tpu.memory_space<vmem>>, %arg4: memref<16x128xf32, #tpu.memory_space<vmem>>) attributes {dimension_semantics = [#tpu.dimension_semantics<parallel>, #tpu.dimension_semantics<parallel>], iteration_bounds = array<i64: 1, 1>, scalar_prefetch = 0 : i64, scratch_operands = 0 : i64, tpu.core_type = #tpu.core_type<tc>, window_params = [{transform_indices = @transform_0, window_bounds = array<i64: 16, 21>}, {transform_indices = @transform_1, window_bounds = array<i64: 21, 128>}, {transform_indices = @transform_2, window_bounds = array<i64: 16, 128>}]} {
    %c0 = arith.constant 0 : index
    %c0_0 = arith.constant 0 : index
    %0 = vector.load %arg2[%c0, %c0_0] : memref<16x21xbf16, #tpu.memory_space<vmem>>, vector<16x21xbf16>
    %c0_1 = arith.constant 0 : index
    %c0_2 = arith.constant 0 : index
    %1 = vector.load %arg3[%c0_1, %c0_2] : memref<21x128xbf16, #tpu.memory_space<vmem>>, vector<21x128xbf16>
    %cst = arith.constant dense<0.000000e+00> : vector<16x128xf32>
    %2 = tpu.matmul %0, %1, %cst {dimension_numbers = #tpu.dot_dimension_numbers<[1], [0], [0], [1], [0, 0, 1, 1], [], []>} : vector<16x21xbf16>, vector<21x128xbf16>, vector<16x128xf32> -> vector<16x128xf32>
    %c0_3 = arith.constant 0 : index
    %c0_4 = arith.constant 0 : index
    %3 = vector.load %arg4[%c0_3, %c0_4] : memref<16x128xf32, #tpu.memory_space<vmem>>, vector<16x128xf32>
    tpu.vector_store %arg4[%c0_3, %c0_4], %2 {strides = array<i32>} : memref<16x128xf32, #tpu.memory_space<vmem>>, vector<16x128xf32>,
    return
  }
  func.func @transform_0(%arg0: i32, %arg1: i32) -> (i32, i32) {
    %c0_i32 = arith.constant 0 : i32
    %c0_i32_0 = arith.constant 0 : i32
    return %arg1, %c0_i32 : i32, i32
  }
  func.func @transform_1(%arg0: i32, %arg1: i32) -> (i32, i32) {
    %c0_i32 = arith.constant 0 : i32
    %c0_i32_0 = arith.constant 0 : i32
    return %c0_i32, %arg0 : i32, i32
  }
  func.func @transform_2(%arg0: i32, %arg1: i32) -> (i32, i32) {
    %c0_i32 = arith.constant 0 : i32
    return %arg1, %arg0 : i32, i32
  }
}

</mosaic_0001>

<llo_original>
// kernel: funk_svd_forward.1
$region0: #{funk_svd_forward.1}
  #allocation0 [shape = 'u32[]', space=smem, size = 0x4, offset = 0x4, fixed_abs, tag = 'smem constant byte address 0x4 - core index']
  #allocation1 [shape = 'u32[72,128]{1,0:T(1,128)}', space=vmem, size = 0x9000, scoped, tag = 'internal scratch']
  %s0 = inlined_call_operand.vmem [shape: bf16[16,21], index: 0, kind: input, shape index: {}]
  %s1 = inlined_call_operand.vmem [shape: bf16[21,128], index: 1, kind: input, shape index: {}]
  %s2 = inlined_call_operand.hbm [shape: f32[8,8], index: 2, kind: output, shape index: {}]
  %s3 = sld [smem:[#allocation0]]
  $region18: #{funk_svd_forward.1} parent=0
    _
  %s5 = ssub.s32 1, %s3
  %s6 = scalar_select 0, %s5, %s3
  $region1: #{funk_svd_forward.1} parent=0
    #allocation2 [shape = 'u8[8192]{0}', space=vmem, size = 0x2000, scoped, tag = 'output window, operand 0, single buffered']
    #allocation3 [shape = 's32[1]{0}', space=sflag, size = 0x4, scoped, tag = 'scoped memory for funk_svd_forward.1']
    %7 = vsyncpa [#allocation3], 0
    // Predicated region
    $region2: #{funk_svd_forward.1} parent=1 // pred_check
      _
    $region3: #{funk_svd_forward.1} parent=1 // pred_check_branch
      %9 = sbr.rel (0) target = $region5
    $region4: #{funk_svd_forward.1} parent=1 // pred_region
      _
    $region5: #{funk_svd_forward.1} parent=1 // pred_fallthru
      _
    // Predicated region
    $region6: #{funk_svd_forward.1} parent=1 // pred_check
      _
    $region7: #{funk_svd_forward.1} parent=1 // pred_check_branch
      %11 = sbr.rel (0) target = $region9
    $region8: #{funk_svd_forward.1} parent=1 // pred_region
      _
    $region9: #{funk_svd_forward.1} parent=1 // pred_fallthru
      _
    %v13 = vld [vmem:[%s0] sm:$0xf]
    %v14 = vld [vmem:[%s0 + $0x4] sm:$0xf]
    %v15 = vld [vmem:[%s1] sm:$0xf]
    %v16 = vld [vmem:[%s1 + $0x4] sm:$0xf]
    %v17 = vld [vmem:[%s1 + $0x8] sm:$0x7]
    %v20 = vunpack.c.l.b16 %v13
    %v21 = vunpack.c.l.b16 %v14
    %v22 = vpack.c.b16 %v21, %v20
    %v26 = vunpack.c.l.b16 %v15
    %v27 = vunpack.c.l.b16 %v16
    %v28 = vunpack.c.l.b16 %v17
    %v29 = vpack.c.b16 %v27, %v26
    %v30 = vpack.c.b16 %v28, %v28
    %vm32 = vcmask 171008
    %v34 = vsel %vm32, %v22, 0
    %vm36 = vcmask 1041408
    %vm37 = vcmask 1042432
    %v38 = vsel %vm36, 4294967295, 65535
    %v39 = vsel %vm37, %v38, 0
    %v41 = vand.u32 %v30, %v39
    %43 = vmatpush.bf16.msra.mxu0 0
    %44 = vmatpush.bf16.msra.mxu0 0
    %45 = vmatpush.bf16.msra.mxu0 0
    %46 = vmatpush.bf16.msra.mxu0 0
    %47 = vmatpush.bf16.msra.mxu0 0
    %48 = vmatpush.bf16.msra.mxu0 0
    %49 = vmatpush.bf16.msra.mxu0 %v41
    %50 = vmatpush.bf16.msra.mxu0 %v29
    %51 = vmatmul.bf16.gmra.mxu0 %v34
    %v52 = vpop.f32.mrf.mxu0
    %v53 = vadd.f32 0.0, %v52
    %v54 = vpop.f32.mrf.mxu0
    %v55 = vadd.f32 0.0, %v54
    %56 = vdwg.mxu0
    %57 = vst [vmem:[#allocation2] sm:$0xff] %v53
    %58 = vst [vmem:[#allocation2 + $0x8] sm:$0xff] %v55
    // Predicated region
    $region10: #{funk_svd_forward.1} parent=1 // pred_check
      _
    $region11: #{funk_svd_forward.1} parent=1 // pred_check_branch
      %60 = sbr.rel (0) target = $region13
    $region12: #{funk_svd_forward.1} parent=1 // pred_region
      %62 = vsyncadd [#allocation3], 128
      %s63 = sshll.u32 [#allocation2], 4
      %s64 = int_to_ptr.vmem [resolvable:$true] %s63
      %s65 = sshll.u32 %s2, 4
      %s66 = int_to_ptr.hbm [resolvable:$true] %s65
      %71 = dma.vmem_to_hbm [thread:$0]  %s64, 128, %s66, [#allocation3], 128, 128, 8
    $region13: #{funk_svd_forward.1} parent=1 // pred_fallthru
      _
    // Predicated region
    $region14: #{funk_svd_forward.1} parent=1 // pred_check
      _
    $region15: #{funk_svd_forward.1} parent=1 // pred_check_branch
      %73 = sbr.rel (0) target = $region17
    $region16: #{funk_svd_forward.1} parent=1 // pred_region
      %75 = dma.done [#allocation3], 256
    $region17: #{funk_svd_forward.1} parent=1 // pred_fallthru
      _
    %76 = vsyncpa [#allocation3], 1

</llo_original>
